<compile_context>
chip_gen: v7x
topology: tpu7x:2x2x1
jax: 0.10.0
libtpu: 0.0.40
codegen_flags: <defaults>
</compile_context>

<pallas_src>
import functools

import jax
import jax.numpy as jnp
from jax.experimental import pallas as pl
from jax.experimental.pallas import tpu as pltpu

KH = 5           # conv kernel height / stride
C_LAT = 15       # latent channels
LANE = 128       # TPU lane width
TM_MAX = 32768   # max lane-tile along the window axis M


def _round_up(x, m):
    return ((x + m - 1) // m) * m


def _fused_enc_dec_kernel(sid_ref, x_ref, wenc_ref, b_ref, wdect_ref, o_ref):
    # sid_ref:   (n_tiles,) SMEM   tile -> stream id (only used by the index_maps)
    # x_ref:     (KH, TM)          lane-dense window taps of this tile (compute dtype)
    # wenc_ref:  (1, C_LAT, KH)    encoder weight of this tile's stream (compute dtype)
    # b_ref:     (1, C_LAT, 1)     encoder bias, f32 (zeros for encoder3's bias=False)
    # wdect_ref: (1, KH, C_LAT)    transposed decoder weight, f32
    # o_ref:     (KH, TM)          reconstructed window taps (out dtype)
    del sid_ref
    x = x_ref[...]                                                      # (5, TM)
    z = jnp.dot(wenc_ref[0], x, preferred_element_type=jnp.float32)     # (15, TM) f32
    z = jnp.maximum(z + b_ref[0], 0.0)                                  # bias + enc ReLU
    y = jnp.dot(wdect_ref[0], z, preferred_element_type=jnp.float32)    # (5, TM) f32
    o_ref[...] = jnp.maximum(y, 0.0).astype(o_ref.dtype)                # dec ReLU


def networks_forward(params, input1, input2, input3, *,
                     compute_dtype=jnp.bfloat16, out_dtype=jnp.bfloat16):
    """Fused Pallas forward for all three encoder/decoder streams.

    input_i : (N_i, 1, H_i, 1) float32, H_i % 5 == 0.
    Returns three (N_i, 1, H_i, 1) float32 outputs (matching the PyTorch module).

    compute_dtype: MXU operand dtype for x / W_enc (bf16 recommended; accumulation,
                   bias and ReLU are always f32).  Use float32 for a bit-clean path.
    out_dtype:     dtype stored by the kernel before the f32 epilogue (bf16 halves the
                   kernel's HBM write traffic; use float32 on v5e if preferred).
    """
    xs = (input1, input2, input3)
    shapes, Ms = [], []
    for x in xs:
        N, C, H, W = x.shape
        assert C == 1 and W == 1 and H % KH == 0, "expect NCHW (N,1,H,1) with H % 5 == 0"
        shapes.append((N, H))
        Ms.append(N * (H // KH))

    # Lane tile along the window axis; each stream is padded only to its own tile
    # multiple (no padding to the common max), so wasted work is < 1 tile per stream.
    tm = min(TM_MAX, _round_up(max(Ms), LANE))
    Mpads = [_round_up(M, tm) for M in Ms]
    tiles = [Mp // tm for Mp in Mpads]
    n_tiles = sum(tiles)
    M_total = sum(Mpads)

    # Single fused relayout pass per stream: free reshape view -> pad to tile multiple
    # -> lane-dense transpose -> bf16 downcast, then one concat along the lane axis.
    xts = []
    for x, M, Mp in zip(xs, Ms, Mpads):
        xw = x.reshape(M, KH)                             # free view, no data movement
        xw = jnp.pad(xw, ((0, Mp - M), (0, 0)))
        xts.append(xw.T.astype(compute_dtype))            # (5, Mp), lane-dense
    x_cat = jnp.concatenate(xts, axis=1)                  # (5, M_total)

    # Scalar-prefetched tile -> stream map (drives the weight/bias index_maps).
    stream_ids = jnp.concatenate(
        [jnp.full((t,), s, dtype=jnp.int32) for s, t in enumerate(tiles)])

    wenc = jnp.stack([params["enc1_w"].reshape(C_LAT, KH),
                      params["enc2_w"].reshape(C_LAT, KH),
                      params["enc3_w"].reshape(C_LAT, KH)]).astype(compute_dtype)
    benc = jnp.stack([params["enc1_b"].reshape(C_LAT, 1),
                      params["enc2_b"].reshape(C_LAT, 1),
                      params["enc3_b"].reshape(C_LAT, 1)]).astype(jnp.float32)
    wdect = jnp.stack([params["dec1_w"].reshape(C_LAT, KH).T,
                       params["dec2_w"].reshape(C_LAT, KH).T,
                       params["dec3_w"].reshape(C_LAT, KH).T]).astype(jnp.float32)

    weight_bytes = (wenc.size * wenc.dtype.itemsize
                    + benc.size * benc.dtype.itemsize
                    + wdect.size * wdect.dtype.itemsize)
    cost = pl.CostEstimate(
        flops=int((2 * 2 * C_LAT * KH + 2 * C_LAT + KH) * M_total),
        transcendentals=0,
        bytes_accessed=int(x_cat.size * x_cat.dtype.itemsize
                           + KH * M_total * jnp.dtype(out_dtype).itemsize
                           + weight_bytes * n_tiles // 3),
    )

    y_cat = pl.pallas_call(
        _fused_enc_dec_kernel,
        out_shape=jax.ShapeDtypeStruct((KH, M_total), out_dtype),
        grid_spec=pltpu.PrefetchScalarGridSpec(
            num_scalar_prefetch=1,
            grid=(n_tiles,),                               # flat parallel tile axis
            in_specs=[
                pl.BlockSpec((KH, tm), lambda t, sid: (0, t)),            # x tile
                pl.BlockSpec((1, C_LAT, KH), lambda t, sid: (sid[t], 0, 0)),  # W_enc
                pl.BlockSpec((1, C_LAT, 1), lambda t, sid: (sid[t], 0, 0)),   # bias
                pl.BlockSpec((1, KH, C_LAT), lambda t, sid: (sid[t], 0, 0)),  # W_dec^T
            ],
            out_specs=pl.BlockSpec((KH, tm), lambda t, sid: (0, t)),
        ),
        compiler_params=pltpu.CompilerParams(
            dimension_semantics=("parallel",),             # even megacore split on v7x
            vmem_limit_bytes=32 * 1024 * 1024),
        cost_estimate=cost,
    )(stream_ids, x_cat, wenc, benc, wdect)

    # Epilogue: slice each stream's valid windows and restore NCHW (N,1,H,1) f32.
    outs, off = [], 0
    for (N, H), M, Mp in zip(shapes, Ms, Mpads):
        yt = y_cat[:, off:off + M]                         # (5, M)
        outs.append(yt.T.astype(jnp.float32).reshape(N, 1, H, 1))
        off += Mp
    return tuple(outs)


def init_params(key):
    """Deterministic synthetic parameters matching the module's shapes."""
    ks = jax.random.split(key, 8)
    p = {}
    scale = 0.2
    p["enc1_w"] = scale * jax.random.normal(ks[0], (C_LAT, 1, KH, 1), jnp.float32)
    p["enc1_b"] = scale * jax.random.normal(ks[1], (C_LAT,), jnp.float32)
    p["dec1_w"] = scale * jax.random.normal(ks[2], (C_LAT, 1, KH, 1), jnp.float32)
    p["enc2_w"] = scale * jax.random.normal(ks[3], (C_LAT, 1, KH, 1), jnp.float32)
    p["enc2_b"] = scale * jax.random.normal(ks[4], (C_LAT,), jnp.float32)
    p["dec2_w"] = scale * jax.random.normal(ks[5], (C_LAT, 1, KH, 1), jnp.float32)
    p["enc3_w"] = scale * jax.random.normal(ks[6], (C_LAT, 1, KH, 1), jnp.float32)
    p["enc3_b"] = jnp.zeros((C_LAT,), jnp.float32)  # encoder3 has bias=False
    p["dec3_w"] = scale * jax.random.normal(ks[7], (C_LAT, 1, KH, 1), jnp.float32)
    # TODO(synk): self.weight (624, 624) is only used in forward2 (self-expression
    # path), not in forward; kept here only for parameter-shape parity.
    p["weight"] = 0.0001 * jnp.ones((624, 624), jnp.float32)
    return p


def _reference_forward(x, w_enc, b_enc, w_dec):
    # Pure-JAX f32 reference of Conv2d(1,15,(5,1),stride=5)+ReLU then
    # ConvTranspose2d(15,1,(5,1),stride=5)+ReLU for W==1 inputs.
    N, _, H, _ = x.shape
    xb = x.reshape(N, H // KH, KH)                        # (N, Ho, 5)
    we = w_enc.reshape(C_LAT, KH)                         # (15, 5)
    z = jnp.einsum("nhk,ck->nhc", xb, we) + b_enc         # (N, Ho, 15)
    z = jnp.maximum(z, 0.0)
    wd = w_dec.reshape(C_LAT, KH)                         # (15, 5)
    y = jnp.einsum("nhc,ck->nhk", z, wd)                  # (N, Ho, 5)
    y = jnp.maximum(y, 0.0)
    return y.reshape(N, 1, H, 1)


if __name__ == "__main__":
    key = jax.random.PRNGKey(0)
    kp, k1, k2, k3 = jax.random.split(key, 4)
    params = init_params(kp)

    # Small shapes consistent with the module: NCHW, C=1, W=1, H multiple of 5.
    # Different H per stream exercises the per-stream tiling / flat grid path.
    N = 2
    H1, H2, H3 = 20, 25, 30
    input1 = jax.random.normal(k1, (N, 1, H1, 1), jnp.float32)
    input2 = jax.random.normal(k2, (N, 1, H2, 1), jnp.float32)
    input3 = jax.random.normal(k3, (N, 1, H3, 1), jnp.float32)

    fwd = jax.jit(functools.partial(networks_forward, params))
    out1, out2, out3 = fwd(input1, input2, input3)
    jax.block_until_ready((out1, out2, out3))

    # Cross-check against the pure-JAX f32 reference (bf16 MXU operands -> loose tol).
    ref1 = _reference_forward(input1, params["enc1_w"], params["enc1_b"], params["dec1_w"])
    ref2 = _reference_forward(input2, params["enc2_w"], params["enc2_b"], params["dec2_w"])
    ref3 = _reference_forward(input3, params["enc3_w"], params["enc3_b"], params["dec3_w"])
    assert out1.shape == (N, 1, H1, 1)
    assert out2.shape == (N, 1, H2, 1)
    assert out3.shape == (N, 1, H3, 1)
    assert jnp.allclose(out1, ref1, rtol=2e-2, atol=2e-2)
    assert jnp.allclose(out2, ref2, rtol=2e-2, atol=2e-2)
    assert jnp.allclose(out3, ref3, rtol=2e-2, atol=2e-2)

    print("KERNEL_OK")
</pallas_src>

<mosaic_0001>
module attributes {stable_mosaic.version = 11 : i64} {
  func.func @_fused_enc_dec_kernel(%arg0: i32, %arg1: memref<3xi32, #tpu.memory_space<smem>>, %arg2: memref<5x128xbf16, #tpu.memory_space<vmem>>, %arg3: memref<1x15x5xbf16, #tpu.memory_space<vmem>>, %arg4: memref<1x15x1xf32, #tpu.memory_space<vmem>>, %arg5: memref<1x5x15xf32, #tpu.memory_space<vmem>>, %arg6: memref<5x128xbf16, #tpu.memory_space<vmem>>) attributes {dimension_semantics = [#tpu.dimension_semantics<parallel>], iteration_bounds = array<i64: 3>, scalar_prefetch = 1 : i64, scratch_operands = 0 : i64, tpu.core_type = #tpu.core_type<tc>, window_params = [{transform_indices = @transform_0, window_bounds = array<i64: 5, 128>}, {transform_indices = @transform_1, window_bounds = array<i64: 1, 15, 5>}, {transform_indices = @transform_2, window_bounds = array<i64: 1, 15, 1>}, {transform_indices = @transform_3, window_bounds = array<i64: 1, 5, 15>}, {transform_indices = @transform_4, window_bounds = array<i64: 5, 128>}]} {
    %c0 = arith.constant 0 : index
    %c0_0 = arith.constant 0 : index
    %0 = vector.load %arg2[%c0, %c0_0] : memref<5x128xbf16, #tpu.memory_space<vmem>>, vector<5x128xbf16>
    %c0_1 = arith.constant 0 : index
    %c0_2 = arith.constant 0 : index
    %c0_3 = arith.constant 0 : index
    %1 = vector.load %arg3[%c0_1, %c0_2, %c0_3] : memref<1x15x5xbf16, #tpu.memory_space<vmem>>, vector<1x15x5xbf16>
    %2 = vector.shape_cast %1 : vector<1x15x5xbf16> to vector<15x5xbf16>
    %cst = arith.constant dense<0.000000e+00> : vector<15x128xf32>
    %3 = tpu.matmul %2, %0, %cst {dimension_numbers = #tpu.dot_dimension_numbers<[1], [0], [0], [1], [0, 0, 1, 1], [], []>} : vector<15x5xbf16>, vector<5x128xbf16>, vector<15x128xf32> -> vector<15x128xf32>
    %c0_4 = arith.constant 0 : index
    %c0_5 = arith.constant 0 : index
    %c0_6 = arith.constant 0 : index
    %4 = vector.load %arg4[%c0_4, %c0_5, %c0_6] : memref<1x15x1xf32, #tpu.memory_space<vmem>>, vector<1x15x1xf32>
    %5 = vector.shape_cast %4 : vector<1x15x1xf32> to vector<15x1xf32>
    %6 = vector.broadcast %5 : vector<15x1xf32> to vector<15x128xf32>
    %7 = arith.addf %3, %6 : vector<15x128xf32>
    %cst_7 = arith.constant 0.000000e+00 : f32
    %8 = vector.broadcast %cst_7 : f32 to vector<15x128xf32>
    %9 = arith.maximumf %7, %8 : vector<15x128xf32>
    %c0_8 = arith.constant 0 : index
    %c0_9 = arith.constant 0 : index
    %c0_10 = arith.constant 0 : index
    %10 = vector.load %arg5[%c0_8, %c0_9, %c0_10] : memref<1x5x15xf32, #tpu.memory_space<vmem>>, vector<1x5x15xf32>
    %11 = vector.shape_cast %10 : vector<1x5x15xf32> to vector<5x15xf32>
    %cst_11 = arith.constant dense<0.000000e+00> : vector<5x128xf32>
    %12 = tpu.matmul %11, %9, %cst_11 {dimension_numbers = #tpu.dot_dimension_numbers<[1], [0], [0], [1], [0, 0, 1, 1], [], []>} : vector<5x15xf32>, vector<15x128xf32>, vector<5x128xf32> -> vector<5x128xf32>
    %cst_12 = arith.constant 0.000000e+00 : f32
    %13 = vector.broadcast %cst_12 : f32 to vector<5x128xf32>
    %14 = arith.maximumf %12, %13 : vector<5x128xf32>
    %15 = arith.truncf %14 : vector<5x128xf32> to vector<5x128xbf16>
    %c0_13 = arith.constant 0 : index
    %c0_14 = arith.constant 0 : index
    %16 = vector.load %arg6[%c0_13, %c0_14] : memref<5x128xbf16, #tpu.memory_space<vmem>>, vector<5x128xbf16>
    tpu.vector_store %arg6[%c0_13, %c0_14], %15 {strides = array<i32>} : memref<5x128xbf16, #tpu.memory_space<vmem>>, vector<5x128xbf16>,
    return
  }
  func.func @transform_0(%arg0: i32, %arg1: memref<3xi32, #tpu.memory_space<smem>>) -> (i32, i32) {
    %c0_i32 = arith.constant 0 : i32
    %c0_i32_0 = arith.constant 0 : i32
    return %c0_i32, %arg0 : i32, i32
  }
  func.func @transform_1(%arg0: i32, %arg1: memref<3xi32, #tpu.memory_space<smem>>) -> (i32, i32, i32) {
    %0 = arith.index_cast %arg0 : i32 to index
    %1 = memref.load %arg1[%0] : memref<3xi32, #tpu.memory_space<smem>>
    %c0_i32 = arith.constant 0 : i32
    %c0_i32_0 = arith.constant 0 : i32
    %c0_i32_1 = arith.constant 0 : i32
    return %1, %c0_i32, %c0_i32_0 : i32, i32, i32
  }
  func.func @transform_2(%arg0: i32, %arg1: memref<3xi32, #tpu.memory_space<smem>>) -> (i32, i32, i32) {
    %0 = arith.index_cast %arg0 : i32 to index
    %1 = memref.load %arg1[%0] : memref<3xi32, #tpu.memory_space<smem>>
    %c0_i32 = arith.constant 0 : i32
    %c0_i32_0 = arith.constant 0 : i32
    %c0_i32_1 = arith.constant 0 : i32
    return %1, %c0_i32, %c0_i32_0 : i32, i32, i32
  }
  func.func @transform_3(%arg0: i32, %arg1: memref<3xi32, #tpu.memory_space<smem>>) -> (i32, i32, i32) {
    %0 = arith.index_cast %arg0 : i32 to index
    %1 = memref.load %arg1[%0] : memref<3xi32, #tpu.memory_space<smem>>
    %c0_i32 = arith.constant 0 : i32
    %c0_i32_0 = arith.constant 0 : i32
    %c0_i32_1 = arith.constant 0 : i32
    return %1, %c0_i32, %c0_i32_0 : i32, i32, i32
  }
  func.func @transform_4(%arg0: i32, %arg1: memref<3xi32, #tpu.memory_space<smem>>) -> (i32, i32) {
    %c0_i32 = arith.constant 0 : i32
    %c0_i32_0 = arith.constant 0 : i32
    return %c0_i32, %arg0 : i32, i32
  }
}

</mosaic_0001>

<llo_original>
// kernel: networks_forward.1
$region0: #{networks_forward.1}
  #allocation0 [shape = 'u32[]', space=smem, size = 0x4, offset = 0x4, fixed_abs, tag = 'smem constant byte address 0x4 - core index']
  #allocation1 [shape = 'u32[144,128]{1,0:T(1,128)}', space=vmem, size = 0x12000, scoped, tag = 'internal scratch']
  #allocation2 [shape = 's32[1]{0}', space=sflag, size = 0x4, scoped, tag = 'scoped memory for networks_forward.1']
  #allocation3 [shape = 'u8[512]{0}', space=smem, size = 0x200, scoped, tag = 'prefetched SMEM operand 0']
  %s0 = inlined_call_operand.vmem [shape: s32[3], index: 0, kind: input, shape index: {}]
  %s1 = inlined_call_operand.vmem [shape: bf16[5,384], index: 1, kind: input, shape index: {}]
  %s2 = inlined_call_operand.vmem [shape: bf16[3,15,5], index: 2, kind: input, shape index: {}]
  %s3 = inlined_call_operand.vmem [shape: f32[3,15,1], index: 3, kind: input, shape index: {}]
  %s4 = inlined_call_operand.vmem [shape: f32[3,5,15], index: 4, kind: input, shape index: {}]
  %s5 = inlined_call_operand.vmem [shape: bf16[5,384], index: 5, kind: output, shape index: {}]
  %s6 = sld [smem:[#allocation0]]
  $region49: #{networks_forward.1} parent=0
    _
  %s8 = ssub.s32 1, %s6
  %s9 = scalar_select 0, %s8, %s6
  %s10 = sshll.u32 %s0, 4
  %s11 = int_to_ptr.vmem [resolvable:$true] %s10
  %13 = dma.vmem_to_smem %s11, 16, [#allocation3], [#allocation2]
  %14 = dma.done [#allocation2], 16
  %15 = sfence
  loop: start=0, step=1, limit=5
  $region2: #{networks_forward.1} parent=0 // loop_pre_header
    _
  $region3: #{networks_forward.1} parent=0 // loop_header
    %s17 = sphi 0, %s21
    %p18 = scmp.ge.s32.totalorder %s17, 5
    %s27 = sphi 0, %s29
    %s30 = sphi 0, %s27
    %s31 = sphi 0, %s30
    %s47 = sphi 0, %s31
    %s55 = sphi 0, %s57
    %s58 = sphi 0, %s55
    %s59 = sphi 0, %s58
    %s75 = sphi 0, %s59
    %s83 = sphi 0, %s85
    %s86 = sphi 0, %s83
    %s87 = sphi 0, %s86
    %s103 = sphi 0, %s87
    %s111 = sphi 0, %s113
    %s114 = sphi 0, %s111
    %s115 = sphi 0, %s114
    %s131 = sphi 0, %s115
    %s137 = sphi 0, %s139
    %s140 = sphi 0, %s137
    %s141 = sphi 0, %s140
    %s157 = sphi 0, %s141
  $region4: #{networks_forward.1} parent=0 // loop_header_branch
    %20 = sbr.rel (%p18) target = $region8
  $region5: #{networks_forward.1} parent=0 // loop_body
    %s22 = ssub.s32 %s17, 1
    %s23 = ssub.s32 %s17, 2
    %s24 = sadd.s32 %s17, 1
    %s25 = ssub.s32 %s17, %s24
    %p26 = scmp.eq.s32.totalorder %s25, 0
    %s28 = sadd.s32 %s27, 1
    %s29 = scalar_select %p26, %s27, %s28
    %p32 = pneg %p26
    %p33 = scmp.eq.s32.totalorder %s17, 2
    %p34 = por %p32, %p33
    %p35 = scmp.ne.s32.totalorder %s27, %s30
    %p36 = scmp.eq.s32.totalorder %s17, 0
    %p37 = por %p35, %p36
    %p38 = scmp.ne.s32.totalorder %s27, %s30
    %p39 = scmp.eq.s32.totalorder %s22, 2
    %p40 = por %p38, %p39
    %p41 = scmp.ne.s32.totalorder %s30, %s31
    %p42 = scmp.eq.s32.totalorder %s22, 0
    %p43 = por %p41, %p42
    %p44 = scmp.ne.s32.totalorder %s30, %s31
    %p45 = scmp.eq.s32.totalorder %s23, 2
    %p46 = por %p44, %p45
    %p48 = scmp.ne.s32.totalorder %s31, %s47
    %p49 = scmp.eq.s32.totalorder %s23, 0
    %p50 = por %p48, %p49
    %s51 = sld [smem:[#allocation3 + %s17]]
    %s52 = sld [smem:[#allocation3 + %s24]]
    %s53 = ssub.s32 %s51, %s52
    %p54 = scmp.eq.s32.totalorder %s53, 0
    %s56 = sadd.s32 %s55, 1
    %s57 = scalar_select %p54, %s55, %s56
    %p60 = pneg %p54
    %p61 = scmp.eq.s32.totalorder %s17, 2
    %p62 = por %p60, %p61
    %p63 = scmp.ne.s32.totalorder %s55, %s58
    %p64 = scmp.eq.s32.totalorder %s17, 0
    %p65 = por %p63, %p64
    %p66 = scmp.ne.s32.totalorder %s55, %s58
    %p67 = scmp.eq.s32.totalorder %s22, 2
    %p68 = por %p66, %p67
    %p69 = scmp.ne.s32.totalorder %s58, %s59
    %p70 = scmp.eq.s32.totalorder %s22, 0
    %p71 = por %p69, %p70
    %p72 = scmp.ne.s32.totalorder %s58, %s59
    %p73 = scmp.eq.s32.totalorder %s23, 2
    %p74 = por %p72, %p73
    %p76 = scmp.ne.s32.totalorder %s59, %s75
    %p77 = scmp.eq.s32.totalorder %s23, 0
    %p78 = por %p76, %p77
    %s79 = sld [smem:[#allocation3 + %s17]]
    %s80 = sld [smem:[#allocation3 + %s24]]
    %s81 = ssub.s32 %s79, %s80
    %p82 = scmp.eq.s32.totalorder %s81, 0
    %s84 = sadd.s32 %s83, 1
    %s85 = scalar_select %p82, %s83, %s84
    %p88 = pneg %p82
    %p89 = scmp.eq.s32.totalorder %s17, 2
    %p90 = por %p88, %p89
    %p91 = scmp.ne.s32.totalorder %s83, %s86
    %p92 = scmp.eq.s32.totalorder %s17, 0
    %p93 = por %p91, %p92
    %p94 = scmp.ne.s32.totalorder %s83, %s86
    %p95 = scmp.eq.s32.totalorder %s22, 2
    %p96 = por %p94, %p95
    %p97 = scmp.ne.s32.totalorder %s86, %s87
    %p98 = scmp.eq.s32.totalorder %s22, 0
    %p99 = por %p97, %p98
    %p100 = scmp.ne.s32.totalorder %s86, %s87
    %p101 = scmp.eq.s32.totalorder %s23, 2
    %p102 = por %p100, %p101
    %p104 = scmp.ne.s32.totalorder %s87, %s103
    %p105 = scmp.eq.s32.totalorder %s23, 0
    %p106 = por %p104, %p105
    %s107 = sld [smem:[#allocation3 + %s17]]
    %s108 = sld [smem:[#allocation3 + %s24]]
    %s109 = ssub.s32 %s107, %s108
    %p110 = scmp.eq.s32.totalorder %s109, 0
    %s112 = sadd.s32 %s111, 1
    %s113 = scalar_select %p110, %s111, %s112
    %p116 = pneg %p110
    %p117 = scmp.eq.s32.totalorder %s17, 2
    %p118 = por %p116, %p117
    %p119 = scmp.ne.s32.totalorder %s111, %s114
    %p120 = scmp.eq.s32.totalorder %s17, 0
    %p121 = por %p119, %p120
    %p122 = scmp.ne.s32.totalorder %s111, %s114
    %p123 = scmp.eq.s32.totalorder %s22, 2
    %p124 = por %p122, %p123
    %p125 = scmp.ne.s32.totalorder %s114, %s115
    %p126 = scmp.eq.s32.totalorder %s22, 0
    %p127 = por %p125, %p126
    %p128 = scmp.ne.s32.totalorder %s114, %s115
    %p129 = scmp.eq.s32.totalorder %s23, 2
    %p130 = por %p128, %p129
    %p132 = scmp.ne.s32.totalorder %s115, %s131
    %p133 = scmp.eq.s32.totalorder %s23, 0
    %p134 = por %p132, %p133
    %s135 = ssub.s32 %s17, %s24
    %p136 = scmp.eq.s32.totalorder %s135, 0
    %s138 = sadd.s32 %s137, 1
    %s139 = scalar_select %p136, %s137, %s138
    %p142 = pneg %p136
    %p143 = scmp.eq.s32.totalorder %s17, 2
    %p144 = por %p142, %p143
    %p145 = scmp.ne.s32.totalorder %s137, %s140
    %p146 = scmp.eq.s32.totalorder %s17, 0
    %p147 = por %p145, %p146
    %p148 = scmp.ne.s32.totalorder %s137, %s140
    %p149 = scmp.eq.s32.totalorder %s22, 2
    %p150 = por %p148, %p149
    %p151 = scmp.ne.s32.totalorder %s140, %s141
    %p152 = scmp.eq.s32.totalorder %s22, 0
    %p153 = por %p151, %p152
    %p154 = scmp.ne.s32.totalorder %s140, %s141
    %p155 = scmp.eq.s32.totalorder %s23, 2
    %p156 = por %p154, %p155
    %p158 = scmp.ne.s32.totalorder %s141, %s157
    %p159 = scmp.eq.s32.totalorder %s23, 0
    %p160 = por %p158, %p159
    %p161 = scmp.le.s32.totalorder 1, %s17
    %p162 = scmp.lt.s32.totalorder %s17, 4
    %p163 = pnand %p161, %p162
    %p164 = pneg %p163
    // Predicated region
    $region9: #{networks_forward.1} parent=5 // pred_check
      _
    $region10: #{networks_forward.1} parent=5 // pred_check_branch
      %166 = sbr.rel (%p163) target = $region12
    $region11: #{networks_forward.1} parent=5 // pred_region
      %s167 = ssub.s32 %s17, 1
    $region12: #{networks_forward.1} parent=5 // pred_fallthru
      _
    %p168 = scmp.lt.s32.totalorder %s17, 3
    // Predicated region
    $region13: #{networks_forward.1} parent=5 // pred_check
      %p169 = pneg %p168
    $region14: #{networks_forward.1} parent=5 // pred_check_branch
      %171 = sbr.rel (%p169) target = $region16
    $region15: #{networks_forward.1} parent=5 // pred_region
      // Predicated region
      $region17: #{networks_forward.1} parent=15 // pred_check
        %p172 = pneg %p37
      $region18: #{networks_forward.1} parent=15 // pred_check_branch
        %174 = sbr.rel (%p172) target = $region20
      $region19: #{networks_forward.1} parent=15 // pred_region
        %p175 = scmp.lt.s32.totalorder %s17, 2
        %s176 = scalar_select %p175, %s17, 2
        %s177 = smul.addr %s176, 4
        %s178 = scalar_lea.vmem %s1, %s177
      $region20: #{networks_forward.1} parent=15 // pred_fallthru
        _
      // Predicated region
      $region21: #{networks_forward.1} parent=15 // pred_check
        %p179 = pneg %p65
      $region22: #{networks_forward.1} parent=15 // pred_check_branch
        %181 = sbr.rel (%p179) target = $region24
      $region23: #{networks_forward.1} parent=15 // pred_region
        %s182 = sld [smem:[#allocation3 + %s17]]
        %p183 = scmp.lt.s32.totalorder %s182, 2
        %s184 = scalar_select %p183, %s182, 2
        %s185 = smul.addr %s184, 2
        %s186 = smul.addr %s185, 4
        %s187 = scalar_lea.vmem %s2, %s186
        %s188 = sld [smem:[#allocation3 + %s17]]
      $region24: #{networks_forward.1} parent=15 // pred_fallthru
        _
      // Predicated region
      $region25: #{networks_forward.1} parent=15 // pred_check
        %p189 = pneg %p93
      $region26: #{networks_forward.1} parent=15 // pred_check_branch
        %191 = sbr.rel (%p189) target = $region28
      $region27: #{networks_forward.1} parent=15 // pred_region
        %s192 = sld [smem:[#allocation3 + %s17]]
        %p193 = scmp.lt.s32.totalorder %s192, 2
        %s194 = scalar_select %p193, %s192, 2
        %s195 = smul.addr %s194, 2
        %s196 = smul.addr %s195, 8
        %s197 = scalar_lea.vmem %s3, %s196
        %s198 = sld [smem:[#allocation3 + %s17]]
      $region28: #{networks_forward.1} parent=15 // pred_fallthru
        _
      // Predicated region
      $region29: #{networks_forward.1} parent=15 // pred_check
        %p199 = pneg %p121
      $region30: #{networks_forward.1} parent=15 // pred_check_branch
        %201 = sbr.rel (%p199) target = $region32
      $region31: #{networks_forward.1} parent=15 // pred_region
        %s202 = sld [smem:[#allocation3 + %s17]]
        %p203 = scmp.lt.s32.totalorder %s202, 2
        %s204 = scalar_select %p203, %s202, 2
        %s205 = smul.addr %s204, 8
        %s206 = scalar_lea.vmem %s4, %s205
        %s207 = sld [smem:[#allocation3 + %s17]]
      $region32: #{networks_forward.1} parent=15 // pred_fallthru
        _
    $region16: #{networks_forward.1} parent=5 // pred_fallthru
      _
    %p208 = scmp.le.s32.totalorder 1, %s17
    %p209 = scmp.lt.s32.totalorder %s17, 4
    %p210 = pnand %p208, %p209
    %p211 = pneg %p210
    // Predicated region
    $region33: #{networks_forward.1} parent=5 // pred_check
      _
    $region34: #{networks_forward.1} parent=5 // pred_check_branch
      %213 = sbr.rel (%p210) target = $region36
    $region35: #{networks_forward.1} parent=5 // pred_region
      %s214 = ssub.s32 %s17, 1
      %p215 = scmp.lt.s32.totalorder %s22, 2
      %s216 = scalar_select %p215, %s22, 2
      %s217 = smul.addr %s216, 4
      %s218 = scalar_lea.vmem %s1, %s217
      %p219 = pneg %p43
      %p220 = pneg %p40
      %s221 = sld [smem:[#allocation3 + %s22]]
      %p222 = scmp.lt.s32.totalorder %s221, 2
      %s223 = scalar_select %p222, %s221, 2
      %s224 = smul.addr %s223, 2
      %s225 = smul.addr %s224, 4
      %s226 = scalar_lea.vmem %s2, %s225
      %p227 = pneg %p71
      %p228 = pneg %p68
      %s229 = sld [smem:[#allocation3 + %s22]]
      %p230 = scmp.lt.s32.totalorder %s229, 2
      %s231 = scalar_select %p230, %s229, 2
      %s232 = smul.addr %s231, 2
      %s233 = smul.addr %s232, 8
      %s234 = scalar_lea.vmem %s3, %s233
      %p235 = pneg %p99
      %p236 = pneg %p96
      %s237 = sld [smem:[#allocation3 + %s22]]
      %p238 = scmp.lt.s32.totalorder %s237, 2
      %s239 = scalar_select %p238, %s237, 2
      %s240 = smul.addr %s239, 8
      %s241 = scalar_lea.vmem %s4, %s240
      %p242 = pneg %p127
      %p243 = pneg %p124
      %p244 = pneg %p153
      %p245 = pneg %p150
      %p246 = scmp.lt.s32.totalorder %s22, 2
      %s247 = scalar_select %p246, %s22, 2
      %s248 = smul.addr %s247, 4
      %s249 = scalar_lea.vmem %s5, %s248
      %p250 = scmp.lt.s32.totalorder %s22, 2
      %s251 = scalar_select %p250, %s22, 2
      %s252 = smul.addr %s251, 4
      %s253 = scalar_lea.vmem %s1, %s252
      %s254 = sld [smem:[#allocation3 + %s22]]
      %p255 = scmp.lt.s32.totalorder %s254, 2
      %s256 = scalar_select %p255, %s254, 2
      %s257 = smul.addr %s256, 2
      %s258 = smul.addr %s257, 4
      %s259 = scalar_lea.vmem %s2, %s258
      %s260 = sld [smem:[#allocation3 + %s22]]
      %s261 = sld [smem:[#allocation3 + %s22]]
      %p262 = scmp.lt.s32.totalorder %s261, 2
      %s263 = scalar_select %p262, %s261, 2
      %s264 = smul.addr %s263, 2
      %s265 = smul.addr %s264, 8
      %s266 = scalar_lea.vmem %s3, %s265
      %s267 = sld [smem:[#allocation3 + %s22]]
      %s268 = sld [smem:[#allocation3 + %s22]]
      %p269 = scmp.lt.s32.totalorder %s268, 2
      %s270 = scalar_select %p269, %s268, 2
      %s271 = smul.addr %s270, 8
      %s272 = scalar_lea.vmem %s4, %s271
      %s273 = sld [smem:[#allocation3 + %s22]]
      %p274 = scmp.lt.s32.totalorder %s22, 2
      %s275 = scalar_select %p274, %s22, 2
      %s276 = smul.addr %s275, 4
      %s277 = scalar_lea.vmem %s5, %s276
      %v279 = vld [vmem:[%s253] sm:$0x7]
      %v280 = vld [vmem:[%s259] sm:$0xf]
      %v281 = vld [vmem:[%s259 + $0x4] sm:$0xf]
      %v282 = vld [vmem:[%s266] sm:$0xff]
      %v283 = vld [vmem:[%s266 + $0x8] sm:$0x7f]
      %285 = vset.pattern.permute.xlu0 0
      %286 = vperm.xlu0 %285, %v282
      %v287 = vpop.permute.xlu0 %286
      %290 = vset.pattern.permute.xlu0 0
      %291 = vperm.xlu0 %290, %v283
      %v292 = vpop.permute.xlu0 %291
      %v296 = vunpack.c.l.b16 %v280
      %v297 = vunpack.c.l.b16 %v281
      %v298 = vpack.c.b16 %v297, %v296
      %vm299 = vcmask 39936
      %v301 = vsel %vm299, %v298, 0
      %vm303 = vcmask 1041408
      %vm304 = vcmask 1042432
      %v305 = vsel %vm303, 4294967295, 65535
      %v306 = vsel %vm304, %v305, 0
      %v308 = vand.u32 %v279, %v306
      %310 = vmatprep.subr.bf16.mxu0 0
      %311 = vmatpush1.bf16.msra.mxu0 %v308
      %312 = vmatprep.subr.bf16.mxu0 0
      %313 = vmatpush1.bf16.msra.mxu0 0
      %314 = vmatprep.subr.bf16.mxu0 0
      %315 = vmatpush1.bf16.msra.mxu0 0
      %316 = vmatprep.subr.bf16.mxu0 0
      %317 = vmatpush1.bf16.msra.mxu0 0
      %318 = vmatprep.subr.bf16.mxu0 0
      %319 = vmatpush1.bf16.msra.mxu0 0
      %320 = vmatprep.subr.bf16.mxu0 0
      %321 = vmatpush1.bf16.msra.mxu0 0
      %322 = vmatprep.subr.bf16.mxu0 0
      %323 = vmatpush1.bf16.msra.mxu0 0
      %324 = vmatprep.subr.bf16.mxu0 0
      %325 = vmatpush1.bf16.msra.mxu0 0
      %326 = vmatprep.subr.bf16.mxu0 0
      %327 = vmatpush1.bf16.msra.mxu0 0
      %328 = vmatprep.subr.bf16.mxu0 0
      %329 = vmatpush1.bf16.msra.mxu0 0
      %330 = vmatprep.subr.bf16.mxu0 0
      %331 = vmatpush1.bf16.msra.mxu0 0
      %332 = vmatprep.subr.bf16.mxu0 0
      %333 = vmatpush1.bf16.msra.mxu0 0
      %334 = vmatprep.subr.bf16.mxu0 0
      %335 = vmatpush1.bf16.msra.mxu0 0
      %336 = vmatprep.subr.bf16.mxu0 0
      %337 = vmatpush1.bf16.msra.mxu0 0
      %338 = vmatprep.subr.bf16.mxu0 0
      %339 = vmatpush1.bf16.msra.mxu0 0
      %340 = vmatprep.subr.bf16.mxu0 0
      %341 = vmatpush1.bf16.msra.mxu0 0
      %342 = vmatprep.mubr.bf16.mxu0 0
      %343 = vmatmul.mubr.bf16.gmra.mrb[0].mxu0 %v301
      %v344 = vpop.f32.mrb[0].mxu0
      %v345 = vadd.f32 %v287, %v344
      %v346 = vpop.f32.mrb[0].mxu0
      %v347 = vpop.f32.mrb[0].mxu0
      %v348 = vadd.f32 %v292, %v347
      %v349 = vpop.f32.mrb[0].mxu0
      %350 = vdwg.mxu0
      %v351 = vmax.f32 %v345, 0.0
      %v352 = vmax.f32 %v348, 0.0
      %v353 = vld [vmem:[%s272] sm:$0x1f]
      %vm354 = vcmask 121856
      %v356 = vsel %vm354, %v353, 0
      %vm358 = vcmask 1046528
      %v360 = vsel %vm358, %v352, 0
      %362 = vmatprep.subr.mxu0 0.0
      %363 = vmatpush1.msra.mxu0 %v351
      %364 = vmatprep.subr.mxu0 0.0
      %365 = vmatpush1.msra.mxu0 %v360
      %366 = vmatprep.subr.mxu0 0.0
      %367 = vmatpush1.msra.mxu0 0.0
      %368 = vmatprep.subr.mxu0 0.0
      %369 = vmatpush1.msra.mxu0 0.0
      %370 = vmatprep.subr.mxu0 0.0
      %371 = vmatpush1.msra.mxu0 0.0
      %372 = vmatprep.subr.mxu0 0.0
      %373 = vmatpush1.msra.mxu0 0.0
      %374 = vmatprep.subr.mxu0 0.0
      %375 = vmatpush1.msra.mxu0 0.0
      %376 = vmatprep.subr.mxu0 0.0
      %377 = vmatpush1.msra.mxu0 0.0
      %378 = vmatprep.subr.mxu0 0.0
      %379 = vmatpush1.msra.mxu0 0.0
      %380 = vmatprep.subr.mxu0 0.0
      %381 = vmatpush1.msra.mxu0 0.0
      %382 = vmatprep.subr.mxu0 0.0
      %383 = vmatpush1.msra.mxu0 0.0
      %384 = vmatprep.subr.mxu0 0.0
      %385 = vmatpush1.msra.mxu0 0.0
      %386 = vmatprep.subr.mxu0 0.0
      %387 = vmatpush1.msra.mxu0 0.0
      %388 = vmatprep.subr.mxu0 0.0
      %389 = vmatpush1.msra.mxu0 0.0
      %390 = vmatprep.subr.mxu0 0.0
      %391 = vmatpush1.msra.mxu0 0.0
      %392 = vmatprep.subr.mxu0 0.0
      %393 = vmatpush1.msra.mxu0 0.0
      %394 = vmatprep.subr.mxu0 0.0
      %395 = vmatpush1.msra.mxu0 0.0
      %396 = vmatprep.subr.mxu0 0.0
      %397 = vmatpush1.msra.mxu0 0.0
      %398 = vmatprep.subr.mxu0 0.0
      %399 = vmatpush1.msra.mxu0 0.0
      %400 = vmatprep.subr.mxu0 0.0
      %401 = vmatpush1.msra.mxu0 0.0
      %402 = vmatprep.subr.mxu0 0.0
      %403 = vmatpush1.msra.mxu0 0.0
      %404 = vmatprep.subr.mxu0 0.0
      %405 = vmatpush1.msra.mxu0 0.0
      %406 = vmatprep.subr.mxu0 0.0
      %407 = vmatpush1.msra.mxu0 0.0
      %408 = vmatprep.subr.mxu0 0.0
      %409 = vmatpush1.msra.mxu0 0.0
      %410 = vmatprep.subr.mxu0 0.0
      %411 = vmatpush1.msra.mxu0 0.0
      %412 = vmatprep.subr.mxu0 0.0
      %413 = vmatpush1.msra.mxu0 0.0
      %414 = vmatprep.subr.mxu0 0.0
      %415 = vmatpush1.msra.mxu0 0.0
      %416 = vmatprep.subr.mxu0 0.0
      %417 = vmatpush1.msra.mxu0 0.0
      %418 = vmatprep.subr.mxu0 0.0
      %419 = vmatpush1.msra.mxu0 0.0
      %420 = vmatprep.subr.mxu0 0.0
      %421 = vmatpush1.msra.mxu0 0.0
      %422 = vmatprep.subr.mxu0 0.0
      %423 = vmatpush1.msra.mxu0 0.0
      %424 = vmatprep.subr.mxu0 0.0
      %425 = vmatpush1.msra.mxu0 0.0
      %426 = vmatprep.mubr.f32.mxu0 0.0
      %427 = vmatmul.mubr.f32.gmra.mrb[0].mxu0 %v356
      %v428 = vpop.f32.mrb[0].mxu0
      %v429 = vadd.f32 0.0, %v428
      %v430 = vpop.f32.mrb[0].mxu0
      %431 = vdwg.mxu0
      %v432 = vmax.f32 %v429, 0.0
      %v433 = vpack.c.bf16 %v432, %v432
      %vm434 = vcmask 1042432
      %vm435 = vsmask.f32 2304
      %vm436 = vmand %vm434, %vm435
      %v437 = vld [vmem:[%s277] sm:$0x7]
      %v438 = vsel %vm436, %v433, %v437
      %439 = vst [vmem:[%s277] sm:$0x7] %v438
      %p440 = scmp.lt.s32.totalorder %s22, 2
      %s441 = scalar_select %p440, %s22, 2
      %s442 = smul.addr %s441, 4
      %s443 = scalar_lea.vmem %s5, %s442
      // Predicated region
      $region37: #{networks_forward.1} parent=35 // pred_check
        %p444 = pneg %p150
      $region38: #{networks_forward.1} parent=35 // pred_check_branch
        %446 = sbr.rel (%p444) target = $region40
      $region39: #{networks_forward.1} parent=35 // pred_region
        _
      $region40: #{networks_forward.1} parent=35 // pred_fallthru
        _
    $region36: #{networks_forward.1} parent=5 // pred_fallthru
      _
    %p447 = scmp.le.s32.totalorder 2, %s17
    // Predicated region
    $region41: #{networks_forward.1} parent=5 // pred_check
      %p448 = pneg %p447
    $region42: #{networks_forward.1} parent=5 // pred_check_branch
      %450 = sbr.rel (%p448) target = $region44
    $region43: #{networks_forward.1} parent=5 // pred_region
      %s451 = ssub.s32 %s17, 2
      // Predicated region
      $region45: #{networks_forward.1} parent=43 // pred_check
        %p452 = pneg %p156
      $region46: #{networks_forward.1} parent=43 // pred_check_branch
        %454 = sbr.rel (%p452) target = $region48
      $region47: #{networks_forward.1} parent=43 // pred_region
        %p455 = scmp.lt.s32.totalorder %s23, 2
        %s456 = scalar_select %p455, %s23, 2
        %s457 = smul.addr %s456, 4
        %s458 = scalar_lea.vmem %s5, %s457
      $region48: #{networks_forward.1} parent=43 // pred_fallthru
        _
    $region44: #{networks_forward.1} parent=5 // pred_fallthru
      _
  $region6: #{networks_forward.1} parent=0 // loop_footer
    %s21 = sadd.s32 1, %s17
  $region7: #{networks_forward.1} parent=0 // loop_footer_branch
    %16 = sbr.rel target = $region3
  $region8: #{networks_forward.1} parent=0 // loop_exit
    _

</llo_original>
